<compile_context>
chip_gen: v6e
topology: v6e:2x2x1
jax: 0.10.0
libtpu: 0.0.40
codegen_flags: <defaults>
</compile_context>

<pallas_src>
import functools

import jax
import jax.numpy as jnp
from jax import lax
from jax.experimental import pallas as pl
from jax.experimental.pallas import tpu as pltpu


COMPUTE_DTYPE = jnp.bfloat16  # MXU operand dtype


@functools.lru_cache(maxsize=1)
def _vmem_limit_bytes():
    """Generation-aware scoped-VMEM limit (conservative default if query fails)."""
    cap = 64 * 1024 * 1024
    try:
        cap = int(pltpu.get_tpu_info().vmem_capacity_bytes)
    except Exception:
        pass
    if cap >= 128 * 1024 * 1024:          # v5e / v6e
        return 100 * 1024 * 1024
    return 48 * 1024 * 1024               # v7x (64 MiB physical) or unknown


def _round_up(x, m):
    return ((x + m - 1) // m) * m


def _pick_tile(dim, target, multiple):
    """Largest tile <= target that divides `dim` and is a multiple of `multiple`
    (falls back to the full dim, which is always layout-legal)."""
    if dim <= target:
        return dim
    for t in range(target, multiple - 1, -1):
        if dim % t == 0 and t % multiple == 0:
            return t
    return dim


# ----------------------------- linear kernel (kv) --------------------------- #

def _matmul_kernel(x_ref, w_ref, o_ref, acc_ref):
    @pl.when(pl.program_id(2) == 0)
    def _():
        acc_ref[...] = jnp.zeros_like(acc_ref)

    acc_ref[...] += jnp.dot(x_ref[...], w_ref[...],
                            preferred_element_type=jnp.float32)

    @pl.when(pl.program_id(2) == pl.num_programs(2) - 1)
    def _():
        o_ref[...] = acc_ref[...].astype(o_ref.dtype)


def pallas_linear(x, wt, *, tm_target=512, tn_target=512, tk_target=512,
                  out_dtype=None):
    """y = x @ wt; x: (B, N, Din) bf16, wt pre-transposed: (Din, Dout) bf16."""
    B, N, Din = x.shape
    Dout = wt.shape[1]
    BN = B * N
    x2 = x.reshape(BN, Din)
    out_dtype = out_dtype or x.dtype

    tm = _pick_tile(BN, tm_target, 16)     # bf16 sublane packing is (16, 128)
    tn = _pick_tile(Dout, tn_target, 128)
    tk = _pick_tile(Din, tk_target, 128)
    grid = (BN // tm, Dout // tn, Din // tk)

    out = pl.pallas_call(
        _matmul_kernel,
        out_shape=jax.ShapeDtypeStruct((BN, Dout), out_dtype),
        grid_spec=pltpu.PrefetchScalarGridSpec(
            num_scalar_prefetch=0,
            grid=grid,
            in_specs=[
                pl.BlockSpec((tm, tk), lambda i, j, k: (i, k)),
                pl.BlockSpec((tk, tn), lambda i, j, k: (k, j)),
            ],
            out_specs=pl.BlockSpec((tm, tn), lambda i, j, k: (i, j)),
            scratch_shapes=[pltpu.VMEM((tm, tn), jnp.float32)],
        ),
        compiler_params=pltpu.CompilerParams(
            dimension_semantics=("parallel", "parallel", "arbitrary"),
            vmem_limit_bytes=_vmem_limit_bytes(),
        ),
    )(x2, wt)
    return out.reshape(B, N, Dout)


# ------------------------ fused q-proj + attention + out-proj --------------- #

def _attn_kernel(x_ref, kv_ref, wq_ref, wo_ref, bo_ref, o_ref, ctx_ref,
                 *, heads, dim_head, kv_len):
    # x_ref:   (1, tq, Dq)          bf16  query-side activations
    # kv_ref:  (1, M_pad, 2*inner)  bf16  [:inner]=K heads, [inner:]=V heads
    # wq_ref:  (Dq, inner)          bf16  scale pre-folded
    # wo_ref:  (inner, Dq_out)      bf16
    # bo_ref:  (1, Dq_out)          f32
    # o_ref:   (1, tq, Dq_out)
    # ctx_ref: (tq, inner)          bf16 VMEM scratch (per-head PV results)
    x = x_ref[0]
    kv = kv_ref[0]
    inner = heads * dim_head
    m_pad = kv.shape[0]

    # Fused q projection (scale folded into wq); keep MXU operands in bf16.
    q = jnp.dot(x, wq_ref[...], preferred_element_type=jnp.float32)
    q = q.astype(kv.dtype)                            # (tq, inner)

    if kv_len < m_pad:
        col = lax.broadcasted_iota(jnp.int32, (1, m_pad), 1)
        valid = col < kv_len
    else:
        valid = None

    for h in range(heads):                            # static unroll over heads
        lo = h * dim_head
        qh = q[:, lo:lo + dim_head]                   # (tq, d)
        kh = kv[:, lo:lo + dim_head]                  # (M_pad, d)
        vh = kv[:, inner + lo:inner + lo + dim_head]  # (M_pad, d)

        # contract last dims directly (no explicit transpose of k)
        sim = lax.dot_general(qh, kh, (((1,), (1,)), ((), ())),
                              preferred_element_type=jnp.float32)
        if valid is not None:
            sim = jnp.where(valid, sim, -1e30)

        m = jnp.max(sim, axis=-1, keepdims=True)      # f32 softmax math
        p = jnp.exp(sim - m)
        denom = jnp.sum(p, axis=-1, keepdims=True)
        attn = (p * pl.reciprocal(denom, approx=True)).astype(vh.dtype)
        pv = jnp.dot(attn, vh, preferred_element_type=jnp.float32)
        ctx_ref[:, lo:lo + dim_head] = pv.astype(ctx_ref.dtype)

    # Fused to_out projection + bias; single lane-dense (tq, Dq_out) store.
    out = jnp.dot(ctx_ref[...], wo_ref[...], preferred_element_type=jnp.float32)
    o_ref[0] = (out + bo_ref[...].astype(jnp.float32)).astype(o_ref.dtype)


def pallas_fused_attention(x, kv, wq, wo, bo, *, heads, dim_head, kv_len,
                           out_dtype, tq_target=256):
    """x: (B, N, Dq) bf16; kv: (B, M_pad, 2*inner) bf16 -> (B, N, Dq_out)."""
    B, N, Dq = x.shape
    M_pad = kv.shape[1]
    inner = heads * dim_head
    Do = wo.shape[1]

    tq = _pick_tile(N, tq_target, 16)
    if B == 1 and N // tq < 2:
        # v7x has 2 TensorCores per chip: make sure a parallel axis has >=2 programs.
        half = _pick_tile(N, max(16, N // 2), 16)
        if N // half >= 2:
            tq = half

    kernel = functools.partial(_attn_kernel, heads=heads, dim_head=dim_head,
                               kv_len=kv_len)
    return pl.pallas_call(
        kernel,
        out_shape=jax.ShapeDtypeStruct((B, N, Do), out_dtype),
        grid_spec=pltpu.PrefetchScalarGridSpec(
            num_scalar_prefetch=0,
            grid=(B, N // tq),
            in_specs=[
                pl.BlockSpec((1, tq, Dq), lambda b, i: (b, i, 0)),
                pl.BlockSpec((1, M_pad, 2 * inner), lambda b, i: (b, 0, 0)),
                pl.BlockSpec((Dq, inner), lambda b, i: (0, 0)),      # resident weights
                pl.BlockSpec((inner, Do), lambda b, i: (0, 0)),
                pl.BlockSpec((1, Do), lambda b, i: (0, 0)),
            ],
            out_specs=pl.BlockSpec((1, tq, Do), lambda b, i: (b, i, 0)),
            scratch_shapes=[pltpu.VMEM((tq, inner), kv.dtype)],
        ),
        compiler_params=pltpu.CompilerParams(
            dimension_semantics=("parallel", "parallel"),
            vmem_limit_bytes=_vmem_limit_bytes(),
        ),
    )(x, kv, wq, wo, bo)


# --------------------------------- module ---------------------------------- #

class PatchedCrossAttentionPallas:
    """Deterministic, synthetic-weight equivalent of PatchedCrossAttention (eval mode)."""

    def __init__(self, query_dim, context_dim=None, heads=8, dim_head=64,
                 dropout=0.0, key=jax.random.PRNGKey(0)):
        inner_dim = dim_head * heads
        context_dim = context_dim or query_dim
        self.heads = heads
        self.dim_head = dim_head
        self.scale = dim_head ** (-0.5)

        kq, kk, kv, ko, kb = jax.random.split(key, 5)

        def init_linear(k, fan_in, fan_out):
            bound = 1.0 / (fan_in ** 0.5)
            return jax.random.uniform(k, (fan_out, fan_in), jnp.float32, -bound, bound)

        # PyTorch-convention f32 weights (Dout, Din) kept for the reference path.
        self.w_q = init_linear(kq, query_dim, inner_dim)
        self.w_k = init_linear(kk, context_dim, inner_dim)
        self.w_v = init_linear(kv, context_dim, inner_dim)
        self.w_o = init_linear(ko, inner_dim, query_dim)
        bound_o = 1.0 / (inner_dim ** 0.5)
        self.b_o = jax.random.uniform(kb, (query_dim,), jnp.float32, -bound_o, bound_o)

        # Kernel-side weights: pre-transposed, scale folded into Wq, k/v fused,
        # all cast to bf16 for the MXU.
        self.wq_t = (self.w_q.T * self.scale).astype(COMPUTE_DTYPE)       # (Dq, inner)
        self.wkv_t = jnp.concatenate([self.w_k.T, self.w_v.T],
                                     axis=1).astype(COMPUTE_DTYPE)        # (Dc, 2*inner)
        self.wo_t = self.w_o.T.astype(COMPUTE_DTYPE)                      # (inner, Dq)
        self.b_o2 = self.b_o.reshape(1, -1)                               # f32 bias
        # Dropout(p) is identity at inference time — no-op here.

    def __call__(self, x, context=None):
        if context is None:
            context = x
        M = context.shape[1]

        # Pad context length to a lane-friendly multiple of 128; masked in-kernel.
        M_pad = _round_up(M, 128)
        ctx = context.astype(COMPUTE_DTYPE)
        if M_pad != M:
            ctx = jnp.pad(ctx, ((0, 0), (0, M_pad - M), (0, 0)))

        kv = pallas_linear(ctx, self.wkv_t, out_dtype=COMPUTE_DTYPE)      # (B, M_pad, 2*inner)
        return pallas_fused_attention(
            x.astype(COMPUTE_DTYPE), kv, self.wq_t, self.wo_t, self.b_o2,
            heads=self.heads, dim_head=self.dim_head, kv_len=M,
            out_dtype=x.dtype)


# -------------------------------- reference -------------------------------- #

def reference_forward(module, x, context=None):
    if context is None:
        context = x
    h, d = module.heads, module.dim_head
    q = x @ module.w_q.T
    k = context @ module.w_k.T
    v = context @ module.w_v.T

    def split(t):
        b, n, _ = t.shape
        return t.reshape(b, n, h, d).transpose(0, 2, 1, 3).reshape(b * h, n, d)

    qh, kh, vh = split(q), split(k), split(v)
    sim = jnp.einsum("bid,bjd->bij", qh, kh) * module.scale
    attn = jax.nn.softmax(sim, axis=-1)
    oh = jnp.einsum("bij,bjd->bid", attn, vh)
    B, N = x.shape[0], x.shape[1]
    out = oh.reshape(B, h, N, d).transpose(0, 2, 1, 3).reshape(B, N, h * d)
    return out @ module.w_o.T + module.b_o


# ---------------------------------- main ----------------------------------- #

if __name__ == "__main__":
    key = jax.random.PRNGKey(0)
    k_x, k_ctx, k_w = jax.random.split(key, 3)

    B, N, M = 2, 16, 8
    query_dim, context_dim = 32, 48
    heads, dim_head = 2, 16

    x = jax.random.normal(k_x, (B, N, query_dim), jnp.float32)
    context = jax.random.normal(k_ctx, (B, M, context_dim), jnp.float32)

    module = PatchedCrossAttentionPallas(
        query_dim=query_dim, context_dim=context_dim,
        heads=heads, dim_head=dim_head, key=k_w,
    )

    out = module(x, context)
    out = jax.block_until_ready(out)

    ref = reference_forward(module, x, context)
    assert out.shape == (B, N, query_dim)
    # bf16 MXU operands: compare against the f32 reference with a bf16-appropriate tolerance.
    assert jnp.allclose(out.astype(jnp.float32), ref, atol=3e-2, rtol=3e-2), \
        "mismatch vs reference"

    print("KERNEL_OK")
</pallas_src>

<mosaic_0001>
module attributes {stable_mosaic.version = 11 : i64} {
  func.func @_matmul_kernel(%arg0: i32, %arg1: i32, %arg2: i32, %arg3: memref<256x48xbf16, #tpu.memory_space<vmem>>, %arg4: memref<48x64xbf16, #tpu.memory_space<vmem>>, %arg5: memref<256x64xbf16, #tpu.memory_space<vmem>>, %arg6: memref<256x64xf32, #tpu.memory_space<vmem>>) attributes {dimension_semantics = [#tpu.dimension_semantics<parallel>, #tpu.dimension_semantics<parallel>, #tpu.dimension_semantics<arbitrary>], iteration_bounds = array<i64: 1, 1, 1>, scalar_prefetch = 0 : i64, scratch_operands = 1 : i64, tpu.core_type = #tpu.core_type<tc>, window_params = [{transform_indices = @transform_0, window_bounds = array<i64: 256, 48>}, {transform_indices = @transform_1, window_bounds = array<i64: 48, 64>}, {transform_indices = @transform_2, window_bounds = array<i64: 256, 64>}]} {
    %c0_i32 = arith.constant 0 : i32
    %0 = arith.cmpi eq, %arg2, %c0_i32 : i32
    %1 = arith.extui %0 : i1 to i32
    %c0_i32_0 = arith.constant 0 : i32
    %2 = arith.cmpi ne, %1, %c0_i32_0 : i32
    scf.if %2 {
      %cst_10 = arith.constant 0.000000e+00 : f32
      %12 = vector.broadcast %cst_10 : f32 to vector<256x64xf32>
      %c0_11 = arith.constant 0 : index
      %c0_12 = arith.constant 0 : index
      %13 = vector.load %arg6[%c0_11, %c0_12] : memref<256x64xf32, #tpu.memory_space<vmem>>, vector<256x64xf32>
      tpu.vector_store %arg6[%c0_11, %c0_12], %12 {strides = array<i32>} : memref<256x64xf32, #tpu.memory_space<vmem>>, vector<256x64xf32>,
    } else {
    }
    %c0 = arith.constant 0 : index
    %c0_1 = arith.constant 0 : index
    %3 = vector.load %arg6[%c0, %c0_1] : memref<256x64xf32, #tpu.memory_space<vmem>>, vector<256x64xf32>
    %c0_2 = arith.constant 0 : index
    %c0_3 = arith.constant 0 : index
    %4 = vector.load %arg3[%c0_2, %c0_3] : memref<256x48xbf16, #tpu.memory_space<vmem>>, vector<256x48xbf16>
    %c0_4 = arith.constant 0 : index
    %c0_5 = arith.constant 0 : index
    %5 = vector.load %arg4[%c0_4, %c0_5] : memref<48x64xbf16, #tpu.memory_space<vmem>>, vector<48x64xbf16>
    %cst = arith.constant dense<0.000000e+00> : vector<256x64xf32>
    %6 = tpu.matmul %4, %5, %cst {dimension_numbers = #tpu.dot_dimension_numbers<[1], [0], [0], [1], [0, 0, 1, 1], [], []>} : vector<256x48xbf16>, vector<48x64xbf16>, vector<256x64xf32> -> vector<256x64xf32>
    %7 = arith.addf %3, %6 : vector<256x64xf32>
    %c0_6 = arith.constant 0 : index
    %c0_7 = arith.constant 0 : index
    %8 = vector.load %arg6[%c0_6, %c0_7] : memref<256x64xf32, #tpu.memory_space<vmem>>, vector<256x64xf32>
    tpu.vector_store %arg6[%c0_6, %c0_7], %7 {strides = array<i32>} : memref<256x64xf32, #tpu.memory_space<vmem>>, vector<256x64xf32>,
    %c0_i32_8 = arith.constant 0 : i32
    %9 = arith.cmpi eq, %arg2, %c0_i32_8 : i32
    %10 = arith.extui %9 : i1 to i32
    %c0_i32_9 = arith.constant 0 : i32
    %11 = arith.cmpi ne, %10, %c0_i32_9 : i32
    scf.if %11 {
      %c0_10 = arith.constant 0 : index
      %c0_11 = arith.constant 0 : index
      %12 = vector.load %arg6[%c0_10, %c0_11] : memref<256x64xf32, #tpu.memory_space<vmem>>, vector<256x64xf32>
      %13 = arith.truncf %12 : vector<256x64xf32> to vector<256x64xbf16>
      %c0_12 = arith.constant 0 : index
      %c0_13 = arith.constant 0 : index
      %14 = vector.load %arg5[%c0_12, %c0_13] : memref<256x64xbf16, #tpu.memory_space<vmem>>, vector<256x64xbf16>
      tpu.vector_store %arg5[%c0_12, %c0_13], %13 {strides = array<i32>} : memref<256x64xbf16, #tpu.memory_space<vmem>>, vector<256x64xbf16>,
    } else {
    }
    return
  }
  func.func @transform_0(%arg0: i32, %arg1: i32, %arg2: i32) -> (i32, i32) {
    %c0_i32 = arith.constant 0 : i32
    return %arg0, %arg2 : i32, i32
  }
  func.func @transform_1(%arg0: i32, %arg1: i32, %arg2: i32) -> (i32, i32) {
    %c0_i32 = arith.constant 0 : i32
    return %arg2, %arg1 : i32, i32
  }
  func.func @transform_2(%arg0: i32, %arg1: i32, %arg2: i32) -> (i32, i32) {
    %c0_i32 = arith.constant 0 : i32
    return %arg0, %arg1 : i32, i32
  }
}

</mosaic_0001>

<llo_original>
// kernel: tpu_custom_call.1
$region0: #{tpu_custom_call.1}
  #allocation0 [shape = 'u32[]', space=smem, size = 0x4, offset = 0x4, fixed_abs, tag = 'smem constant byte address 0x4 - core index']
  #allocation1 [shape = 'u32[144,128]{1,0:T(1,128)}', space=vmem, size = 0x12000, scoped, tag = 'internal scratch']
  #allocation2 [shape = 'f32[256,64]{1,0:T(8,128)}', space=vmem, size = 0x20000, scoped, tag = 'scratch operand']
  %s0 = inlined_call_operand.vmem [shape: bf16[256,48], index: 0, kind: input, shape index: {}]
  %s1 = inlined_call_operand.vmem [shape: bf16[48,64], index: 1, kind: input, shape index: {}]
  %s2 = inlined_call_operand.vmem [shape: bf16[256,64], index: 2, kind: output, shape index: {}]
  %s3 = sld [smem:[#allocation0]]
  $region26: #{tpu_custom_call.1} parent=0
    _
  %s5 = ssub.s32 1, %s3
  %s6 = scalar_select 0, %s5, %s3
  // Predicated region
  $region2: #{tpu_custom_call.1} parent=0 // pred_check
    _
  $region3: #{tpu_custom_call.1} parent=0 // pred_check_branch
    %8 = sbr.rel (0) target = $region5
  $region4: #{tpu_custom_call.1} parent=0 // pred_region
    _
  $region5: #{tpu_custom_call.1} parent=0 // pred_fallthru
    _
  // Predicated region
  $region6: #{tpu_custom_call.1} parent=0 // pred_check
    _
  $region7: #{tpu_custom_call.1} parent=0 // pred_check_branch
    %10 = sbr.rel (0) target = $region9
  $region8: #{tpu_custom_call.1} parent=0 // pred_region
    _
  $region9: #{tpu_custom_call.1} parent=0 // pred_fallthru
    _
  %p12 = scmp.eq.s32.totalorder 0, 0
  // Predicated region
  $region10: #{tpu_custom_call.1} parent=0 // pred_check
    %p13 = pneg %p12
  $region11: #{tpu_custom_call.1} parent=0 // pred_check_branch
    %15 = sbr.rel (%p13) target = $region13
  $region12: #{tpu_custom_call.1} parent=0 // pred_region
    %vm16 = vcmask 523264
    %17 = vst.msk [vmem:[#allocation2] sm:$0xff] %vm16, 0.0
    %18 = vst.msk [vmem:[#allocation2 + $0x8] sm:$0xff] %vm16, 0.0
    %19 = vst.msk [vmem:[#allocation2 + $0x10] sm:$0xff] %vm16, 0.0
    %20 = vst.msk [vmem:[#allocation2 + $0x18] sm:$0xff] %vm16, 0.0
    %21 = vst.msk [vmem:[#allocation2 + $0x20] sm:$0xff] %vm16, 0.0
    %22 = vst.msk [vmem:[#allocation2 + $0x28] sm:$0xff] %vm16, 0.0
    %23 = vst.msk [vmem:[#allocation2 + $0x30] sm:$0xff] %vm16, 0.0
    %24 = vst.msk [vmem:[#allocation2 + $0x38] sm:$0xff] %vm16, 0.0
    %25 = vst.msk [vmem:[#allocation2 + $0x40] sm:$0xff] %vm16, 0.0
    %26 = vst.msk [vmem:[#allocation2 + $0x48] sm:$0xff] %vm16, 0.0
    %27 = vst.msk [vmem:[#allocation2 + $0x50] sm:$0xff] %vm16, 0.0
    %28 = vst.msk [vmem:[#allocation2 + $0x58] sm:$0xff] %vm16, 0.0
    %29 = vst.msk [vmem:[#allocation2 + $0x60] sm:$0xff] %vm16, 0.0
    %30 = vst.msk [vmem:[#allocation2 + $0x68] sm:$0xff] %vm16, 0.0
    %31 = vst.msk [vmem:[#allocation2 + $0x70] sm:$0xff] %vm16, 0.0
    %32 = vst.msk [vmem:[#allocation2 + $0x78] sm:$0xff] %vm16, 0.0
    %33 = vst.msk [vmem:[#allocation2 + $0x80] sm:$0xff] %vm16, 0.0
    %34 = vst.msk [vmem:[#allocation2 + $0x88] sm:$0xff] %vm16, 0.0
    %35 = vst.msk [vmem:[#allocation2 + $0x90] sm:$0xff] %vm16, 0.0
    %36 = vst.msk [vmem:[#allocation2 + $0x98] sm:$0xff] %vm16, 0.0
    %37 = vst.msk [vmem:[#allocation2 + $0xa0] sm:$0xff] %vm16, 0.0
    %38 = vst.msk [vmem:[#allocation2 + $0xa8] sm:$0xff] %vm16, 0.0
    %39 = vst.msk [vmem:[#allocation2 + $0xb0] sm:$0xff] %vm16, 0.0
    %40 = vst.msk [vmem:[#allocation2 + $0xb8] sm:$0xff] %vm16, 0.0
    %41 = vst.msk [vmem:[#allocation2 + $0xc0] sm:$0xff] %vm16, 0.0
    %42 = vst.msk [vmem:[#allocation2 + $0xc8] sm:$0xff] %vm16, 0.0
    %43 = vst.msk [vmem:[#allocation2 + $0xd0] sm:$0xff] %vm16, 0.0
    %44 = vst.msk [vmem:[#allocation2 + $0xd8] sm:$0xff] %vm16, 0.0
    %45 = vst.msk [vmem:[#allocation2 + $0xe0] sm:$0xff] %vm16, 0.0
    %46 = vst.msk [vmem:[#allocation2 + $0xe8] sm:$0xff] %vm16, 0.0
    %47 = vst.msk [vmem:[#allocation2 + $0xf0] sm:$0xff] %vm16, 0.0
    %48 = vst.msk [vmem:[#allocation2 + $0xf8] sm:$0xff] %vm16, 0.0
  $region13: #{tpu_custom_call.1} parent=0 // pred_fallthru
    _
  %v49 = vld [vmem:[#allocation2] sm:$0xff]
  %v50 = vld [vmem:[#allocation2 + $0x8] sm:$0xff]
  %v51 = vld [vmem:[#allocation2 + $0x10] sm:$0xff]
  %v52 = vld [vmem:[#allocation2 + $0x18] sm:$0xff]
  %v53 = vld [vmem:[#allocation2 + $0x20] sm:$0xff]
  %v54 = vld [vmem:[#allocation2 + $0x28] sm:$0xff]
  %v55 = vld [vmem:[#allocation2 + $0x30] sm:$0xff]
  %v56 = vld [vmem:[#allocation2 + $0x38] sm:$0xff]
  %v57 = vld [vmem:[#allocation2 + $0x40] sm:$0xff]
  %v58 = vld [vmem:[#allocation2 + $0x48] sm:$0xff]
  %v59 = vld [vmem:[#allocation2 + $0x50] sm:$0xff]
  %v60 = vld [vmem:[#allocation2 + $0x58] sm:$0xff]
  %v61 = vld [vmem:[#allocation2 + $0x60] sm:$0xff]
  %v62 = vld [vmem:[#allocation2 + $0x68] sm:$0xff]
  %v63 = vld [vmem:[#allocation2 + $0x70] sm:$0xff]
  %v64 = vld [vmem:[#allocation2 + $0x78] sm:$0xff]
  %v65 = vld [vmem:[#allocation2 + $0x80] sm:$0xff]
  %v66 = vld [vmem:[#allocation2 + $0x88] sm:$0xff]
  %v67 = vld [vmem:[#allocation2 + $0x90] sm:$0xff]
  %v68 = vld [vmem:[#allocation2 + $0x98] sm:$0xff]
  %v69 = vld [vmem:[#allocation2 + $0xa0] sm:$0xff]
  %v70 = vld [vmem:[#allocation2 + $0xa8] sm:$0xff]
  %v71 = vld [vmem:[#allocation2 + $0xb0] sm:$0xff]
  %v72 = vld [vmem:[#allocation2 + $0xb8] sm:$0xff]
  %v73 = vld [vmem:[#allocation2 + $0xc0] sm:$0xff]
  %v74 = vld [vmem:[#allocation2 + $0xc8] sm:$0xff]
  %v75 = vld [vmem:[#allocation2 + $0xd0] sm:$0xff]
  %v76 = vld [vmem:[#allocation2 + $0xd8] sm:$0xff]
  %v77 = vld [vmem:[#allocation2 + $0xe0] sm:$0xff]
  %v78 = vld [vmem:[#allocation2 + $0xe8] sm:$0xff]
  %v79 = vld [vmem:[#allocation2 + $0xf0] sm:$0xff]
  %v80 = vld [vmem:[#allocation2 + $0xf8] sm:$0xff]
  %v81 = vld [vmem:[%s0] sm:$0xf]
  %v82 = vld [vmem:[%s0 + $0x4] sm:$0xf]
  %v83 = vld [vmem:[%s0 + $0x8] sm:$0xf]
  %v84 = vld [vmem:[%s0 + $0xc] sm:$0xf]
  %v85 = vld [vmem:[%s0 + $0x10] sm:$0xf]
  %v86 = vld [vmem:[%s0 + $0x14] sm:$0xf]
  %v87 = vld [vmem:[%s0 + $0x18] sm:$0xf]
  %v88 = vld [vmem:[%s0 + $0x1c] sm:$0xf]
  %v89 = vld [vmem:[%s0 + $0x20] sm:$0xf]
  %v90 = vld [vmem:[%s0 + $0x24] sm:$0xf]
  %v91 = vld [vmem:[%s0 + $0x28] sm:$0xf]
  %v92 = vld [vmem:[%s0 + $0x2c] sm:$0xf]
  %v93 = vld [vmem:[%s0 + $0x30] sm:$0xf]
  %v94 = vld [vmem:[%s0 + $0x34] sm:$0xf]
  %v95 = vld [vmem:[%s0 + $0x38] sm:$0xf]
  %v96 = vld [vmem:[%s0 + $0x3c] sm:$0xf]
  %v97 = vld [vmem:[%s0 + $0x40] sm:$0xf]
  %v98 = vld [vmem:[%s0 + $0x44] sm:$0xf]
  %v99 = vld [vmem:[%s0 + $0x48] sm:$0xf]
  %v100 = vld [vmem:[%s0 + $0x4c] sm:$0xf]
  %v101 = vld [vmem:[%s0 + $0x50] sm:$0xf]
  %v102 = vld [vmem:[%s0 + $0x54] sm:$0xf]
  %v103 = vld [vmem:[%s0 + $0x58] sm:$0xf]
  %v104 = vld [vmem:[%s0 + $0x5c] sm:$0xf]
  %v105 = vld [vmem:[%s0 + $0x60] sm:$0xf]
  %v106 = vld [vmem:[%s0 + $0x64] sm:$0xf]
  %v107 = vld [vmem:[%s0 + $0x68] sm:$0xf]
  %v108 = vld [vmem:[%s0 + $0x6c] sm:$0xf]
  %v109 = vld [vmem:[%s0 + $0x70] sm:$0xf]
  %v110 = vld [vmem:[%s0 + $0x74] sm:$0xf]
  %v111 = vld [vmem:[%s0 + $0x78] sm:$0xf]
  %v112 = vld [vmem:[%s0 + $0x7c] sm:$0xf]
  %v113 = vld [vmem:[%s1] sm:$0xf]
  %v114 = vld [vmem:[%s1 + $0x4] sm:$0xf]
  %v115 = vld [vmem:[%s1 + $0x8] sm:$0xf]
  %v116 = vld [vmem:[%s1 + $0xc] sm:$0xf]
  %v117 = vld [vmem:[%s1 + $0x10] sm:$0xf]
  %v118 = vld [vmem:[%s1 + $0x14] sm:$0xf]
  %v151 = vunpack.c.l.b16 %v81
  %v152 = vunpack.c.l.b16 %v82
  %v153 = vunpack.c.l.b16 %v83
  %v154 = vunpack.c.l.b16 %v84
  %v155 = vunpack.c.l.b16 %v85
  %v156 = vunpack.c.l.b16 %v86
  %v157 = vunpack.c.l.b16 %v87
  %v158 = vunpack.c.l.b16 %v88
  %v159 = vunpack.c.l.b16 %v89
  %v160 = vunpack.c.l.b16 %v90
  %v161 = vunpack.c.l.b16 %v91
  %v162 = vunpack.c.l.b16 %v92
  %v163 = vunpack.c.l.b16 %v93
  %v164 = vunpack.c.l.b16 %v94
  %v165 = vunpack.c.l.b16 %v95
  %v166 = vunpack.c.l.b16 %v96
  %v167 = vunpack.c.l.b16 %v97
  %v168 = vunpack.c.l.b16 %v98
  %v169 = vunpack.c.l.b16 %v99
  %v170 = vunpack.c.l.b16 %v100
  %v171 = vunpack.c.l.b16 %v101
  %v172 = vunpack.c.l.b16 %v102
  %v173 = vunpack.c.l.b16 %v103
  %v174 = vunpack.c.l.b16 %v104
  %v175 = vunpack.c.l.b16 %v105
  %v176 = vunpack.c.l.b16 %v106
  %v177 = vunpack.c.l.b16 %v107
  %v178 = vunpack.c.l.b16 %v108
  %v179 = vunpack.c.l.b16 %v109
  %v180 = vunpack.c.l.b16 %v110
  %v181 = vunpack.c.l.b16 %v111
  %v182 = vunpack.c.l.b16 %v112
  %v183 = vpack.c.b16 %v152, %v151
  %v184 = vpack.c.b16 %v154, %v153
  %v185 = vpack.c.b16 %v156, %v155
  %v186 = vpack.c.b16 %v158, %v157
  %v187 = vpack.c.b16 %v160, %v159
  %v188 = vpack.c.b16 %v162, %v161
  %v189 = vpack.c.b16 %v164, %v163
  %v190 = vpack.c.b16 %v166, %v165
  %v191 = vpack.c.b16 %v168, %v167
  %v192 = vpack.c.b16 %v170, %v169
  %v193 = vpack.c.b16 %v172, %v171
  %v194 = vpack.c.b16 %v174, %v173
  %v195 = vpack.c.b16 %v176, %v175
  %v196 = vpack.c.b16 %v178, %v177
  %v197 = vpack.c.b16 %v180, %v179
  %v198 = vpack.c.b16 %v182, %v181
  %v205 = vunpack.c.l.b16 %v113
  %v206 = vunpack.c.l.b16 %v114
  %v207 = vunpack.c.l.b16 %v115
  %v208 = vunpack.c.l.b16 %v116
  %v209 = vunpack.c.l.b16 %v117
  %v210 = vunpack.c.l.b16 %v118
  %v211 = vpack.c.b16 %v206, %v205
  %v212 = vpack.c.b16 %v208, %v207
  %v213 = vpack.c.b16 %v210, %v209
  %vm217 = vcmask 392192
  %v219 = vsel %vm217, %v183, 0
  %v222 = vsel %vm217, %v184, 0
  %v225 = vsel %vm217, %v185, 0
  %v228 = vsel %vm217, %v186, 0
  %v231 = vsel %vm217, %v187, 0
  %v234 = vsel %vm217, %v188, 0
  %v237 = vsel %vm217, %v189, 0
  %v240 = vsel %vm217, %v190, 0
  %v243 = vsel %vm217, %v191, 0
  %v246 = vsel %vm217, %v192, 0
  %v249 = vsel %vm217, %v193, 0
  %v252 = vsel %vm217, %v194, 0
  %v255 = vsel %vm217, %v195, 0
  %v258 = vsel %vm217, %v196, 0
  %v261 = vsel %vm217, %v197, 0
  %v264 = vsel %vm217, %v198, 0
  %266 = vmatprep.subr.bf16.mxu0 0
  %267 = vmatpush1.bf16.msra.mxu0 0
  %268 = vmatprep.subr.bf16.mxu0 0
  %269 = vmatpush1.bf16.msra.mxu0 0
  %270 = vmatprep.subr.bf16.mxu0 0
  %271 = vmatpush1.bf16.msra.mxu0 0
  %272 = vmatprep.subr.bf16.mxu0 0
  %273 = vmatpush1.bf16.msra.mxu0 0
  %274 = vmatprep.subr.bf16.mxu0 0
  %275 = vmatpush1.bf16.msra.mxu0 0
  %276 = vmatprep.subr.bf16.mxu0 0
  %277 = vmatpush1.bf16.msra.mxu0 %v213
  %278 = vmatprep.subr.bf16.mxu0 0
  %279 = vmatpush1.bf16.msra.mxu0 %v212
  %280 = vmatprep.subr.bf16.mxu0 0
  %281 = vmatpush1.bf16.msra.mxu0 %v211
  %282 = vmatprep.subr.bf16.mxu0 0
  %283 = vmatpush2.bf16.msra.mxu0 0
  %284 = vmatprep.subr.bf16.mxu0 0
  %285 = vmatpush2.bf16.msra.mxu0 0
  %286 = vmatprep.subr.bf16.mxu0 0
  %287 = vmatpush2.bf16.msra.mxu0 0
  %288 = vmatprep.subr.bf16.mxu0 0
  %289 = vmatpush2.bf16.msra.mxu0 0
  %290 = vmatprep.subr.bf16.mxu0 0
  %291 = vmatpush2.bf16.msra.mxu0 0
  %292 = vmatprep.subr.bf16.mxu0 0
  %293 = vmatpush2.bf16.msra.mxu0 0
  %294 = vmatprep.subr.bf16.mxu0 0
  %295 = vmatpush2.bf16.msra.mxu0 0
  %296 = vmatprep.subr.bf16.mxu0 0
  %297 = vmatpush2.bf16.msra.mxu0 0
  %298 = vmatprep.mubr.bf16.mxu0 0
  %299 = vmatmul.mubr.bf16.gmra.mxu0 %v219
  %v300 = vpop.f32.mrf.mxu0
  %v301 = vadd.f32 0.0, %v300
  %v302 = vpop.f32.mrf.mxu0
  %v303 = vpop.f32.mrf.mxu0
  %v304 = vadd.f32 0.0, %v303
  %v305 = vpop.f32.mrf.mxu0
  %306 = vmatprep.mubr.bf16.mxu0 0
  %307 = vmatmul.mubr.bf16.gmra.mxu0 %v222
  %v308 = vpop.f32.mrf.mxu0
  %v309 = vadd.f32 0.0, %v308
  %v310 = vpop.f32.mrf.mxu0
  %v311 = vpop.f32.mrf.mxu0
  %v312 = vadd.f32 0.0, %v311
  %v313 = vpop.f32.mrf.mxu0
  %314 = vmatprep.mubr.bf16.mxu0 0
  %315 = vmatmul.mubr.bf16.gmra.mxu0 %v225
  %v316 = vpop.f32.mrf.mxu0
  %v317 = vadd.f32 0.0, %v316
  %v318 = vpop.f32.mrf.mxu0
  %v319 = vpop.f32.mrf.mxu0
  %v320 = vadd.f32 0.0, %v319
  %v321 = vpop.f32.mrf.mxu0
  %322 = vmatprep.mubr.bf16.mxu0 0
  %323 = vmatmul.mubr.bf16.gmra.mxu0 %v228
  %v324 = vpop.f32.mrf.mxu0
  %v325 = vadd.f32 0.0, %v324
  %v326 = vpop.f32.mrf.mxu0
  %v327 = vpop.f32.mrf.mxu0
  %v328 = vadd.f32 0.0, %v327
  %v329 = vpop.f32.mrf.mxu0
  %330 = vmatprep.mubr.bf16.mxu0 0
  %331 = vmatmul.mubr.bf16.gmra.mxu0 %v231
  %v332 = vpop.f32.mrf.mxu0
  %v333 = vadd.f32 0.0, %v332
  %v334 = vpop.f32.mrf.mxu0
  %v335 = vpop.f32.mrf.mxu0
  %v336 = vadd.f32 0.0, %v335
  %v337 = vpop.f32.mrf.mxu0
  %338 = vmatprep.mubr.bf16.mxu0 0
  %339 = vmatmul.mubr.bf16.gmra.mxu0 %v234
  %v340 = vpop.f32.mrf.mxu0
  %v341 = vadd.f32 0.0, %v340
  %v342 = vpop.f32.mrf.mxu0
  %v343 = vpop.f32.mrf.mxu0
  %v344 = vadd.f32 0.0, %v343
  %v345 = vpop.f32.mrf.mxu0
  %346 = vmatprep.mubr.bf16.mxu0 0
  %347 = vmatmul.mubr.bf16.gmra.mxu0 %v237
  %v348 = vpop.f32.mrf.mxu0
  %v349 = vadd.f32 0.0, %v348
  %v350 = vpop.f32.mrf.mxu0
  %v351 = vpop.f32.mrf.mxu0
  %v352 = vadd.f32 0.0, %v351
  %v353 = vpop.f32.mrf.mxu0
  %354 = vmatprep.mubr.bf16.mxu0 0
  %355 = vmatmul.mubr.bf16.gmra.mxu0 %v240
  %v356 = vpop.f32.mrf.mxu0
  %v357 = vadd.f32 0.0, %v356
  %v358 = vpop.f32.mrf.mxu0
  %v359 = vpop.f32.mrf.mxu0
  %v360 = vadd.f32 0.0, %v359
  %v361 = vpop.f32.mrf.mxu0
  %362 = vmatprep.mubr.bf16.mxu0 0
  %363 = vmatmul.mubr.bf16.gmra.mxu0 %v243
  %v364 = vpop.f32.mrf.mxu0
  %v365 = vadd.f32 0.0, %v364
  %v366 = vpop.f32.mrf.mxu0
  %v367 = vpop.f32.mrf.mxu0
  %v368 = vadd.f32 0.0, %v367
  %v369 = vpop.f32.mrf.mxu0
  %370 = vmatprep.mubr.bf16.mxu0 0
  %371 = vmatmul.mubr.bf16.gmra.mxu0 %v246
  %v372 = vpop.f32.mrf.mxu0
  %v373 = vadd.f32 0.0, %v372
  %v374 = vpop.f32.mrf.mxu0
  %v375 = vpop.f32.mrf.mxu0
  %v376 = vadd.f32 0.0, %v375
  %v377 = vpop.f32.mrf.mxu0
  %378 = vmatprep.mubr.bf16.mxu0 0
  %379 = vmatmul.mubr.bf16.gmra.mxu0 %v249
  %v380 = vpop.f32.mrf.mxu0
  %v381 = vadd.f32 0.0, %v380
  %v382 = vpop.f32.mrf.mxu0
  %v383 = vpop.f32.mrf.mxu0
  %v384 = vadd.f32 0.0, %v383
  %v385 = vpop.f32.mrf.mxu0
  %386 = vmatprep.mubr.bf16.mxu0 0
  %387 = vmatmul.mubr.bf16.gmra.mxu0 %v252
  %v388 = vpop.f32.mrf.mxu0
  %v389 = vadd.f32 0.0, %v388
  %v390 = vpop.f32.mrf.mxu0
  %v391 = vpop.f32.mrf.mxu0
  %v392 = vadd.f32 0.0, %v391
  %v393 = vpop.f32.mrf.mxu0
  %394 = vmatprep.mubr.bf16.mxu0 0
  %395 = vmatmul.mubr.bf16.gmra.mxu0 %v255
  %v396 = vpop.f32.mrf.mxu0
  %v397 = vadd.f32 0.0, %v396
  %v398 = vpop.f32.mrf.mxu0
  %v399 = vpop.f32.mrf.mxu0
  %v400 = vadd.f32 0.0, %v399
  %v401 = vpop.f32.mrf.mxu0
  %402 = vmatprep.mubr.bf16.mxu0 0
  %403 = vmatmul.mubr.bf16.gmra.mxu0 %v258
  %v404 = vpop.f32.mrf.mxu0
  %v405 = vadd.f32 0.0, %v404
  %v406 = vpop.f32.mrf.mxu0
  %v407 = vpop.f32.mrf.mxu0
  %v408 = vadd.f32 0.0, %v407
  %v409 = vpop.f32.mrf.mxu0
  %410 = vmatprep.mubr.bf16.mxu0 0
  %411 = vmatmul.mubr.bf16.gmra.mxu0 %v261
  %v412 = vpop.f32.mrf.mxu0
  %v413 = vadd.f32 0.0, %v412
  %v414 = vpop.f32.mrf.mxu0
  %v415 = vpop.f32.mrf.mxu0
  %v416 = vadd.f32 0.0, %v415
  %v417 = vpop.f32.mrf.mxu0
  %418 = vmatprep.mubr.bf16.mxu0 0
  %419 = vmatmul.mubr.bf16.gmra.mxu0 %v264
  %v420 = vpop.f32.mrf.mxu0
  %v421 = vadd.f32 0.0, %v420
  %v422 = vpop.f32.mrf.mxu0
  %v423 = vpop.f32.mrf.mxu0
  %v424 = vadd.f32 0.0, %v423
  %v425 = vpop.f32.mrf.mxu0
  %426 = vdwg.mxu0
  %v427 = vadd.f32 %v49, %v301
  %v428 = vadd.f32 %v50, %v304
  %v429 = vadd.f32 %v51, %v309
  %v430 = vadd.f32 %v52, %v312
  %v431 = vadd.f32 %v53, %v317
  %v432 = vadd.f32 %v54, %v320
  %v433 = vadd.f32 %v55, %v325
  %v434 = vadd.f32 %v56, %v328
  %v435 = vadd.f32 %v57, %v333
  %v436 = vadd.f32 %v58, %v336
  %v437 = vadd.f32 %v59, %v341
  %v438 = vadd.f32 %v60, %v344
  %v439 = vadd.f32 %v61, %v349
  %v440 = vadd.f32 %v62, %v352
  %v441 = vadd.f32 %v63, %v357
  %v442 = vadd.f32 %v64, %v360
  %v443 = vadd.f32 %v65, %v365
  %v444 = vadd.f32 %v66, %v368
  %v445 = vadd.f32 %v67, %v373
  %v446 = vadd.f32 %v68, %v376
  %v447 = vadd.f32 %v69, %v381
  %v448 = vadd.f32 %v70, %v384
  %v449 = vadd.f32 %v71, %v389
  %v450 = vadd.f32 %v72, %v392
  %v451 = vadd.f32 %v73, %v397
  %v452 = vadd.f32 %v74, %v400
  %v453 = vadd.f32 %v75, %v405
  %v454 = vadd.f32 %v76, %v408
  %v455 = vadd.f32 %v77, %v413
  %v456 = vadd.f32 %v78, %v416
  %v457 = vadd.f32 %v79, %v421
  %v458 = vadd.f32 %v80, %v424
  %vm459 = vcmask 523264
  %460 = vst.msk [vmem:[#allocation2] sm:$0xff] %vm459, %v427
  %461 = vst.msk [vmem:[#allocation2 + $0x8] sm:$0xff] %vm459, %v428
  %462 = vst.msk [vmem:[#allocation2 + $0x10] sm:$0xff] %vm459, %v429
  %463 = vst.msk [vmem:[#allocation2 + $0x18] sm:$0xff] %vm459, %v430
  %464 = vst.msk [vmem:[#allocation2 + $0x20] sm:$0xff] %vm459, %v431
  %465 = vst.msk [vmem:[#allocation2 + $0x28] sm:$0xff] %vm459, %v432
  %466 = vst.msk [vmem:[#allocation2 + $0x30] sm:$0xff] %vm459, %v433
  %467 = vst.msk [vmem:[#allocation2 + $0x38] sm:$0xff] %vm459, %v434
  %468 = vst.msk [vmem:[#allocation2 + $0x40] sm:$0xff] %vm459, %v435
  %469 = vst.msk [vmem:[#allocation2 + $0x48] sm:$0xff] %vm459, %v436
  %470 = vst.msk [vmem:[#allocation2 + $0x50] sm:$0xff] %vm459, %v437
  %471 = vst.msk [vmem:[#allocation2 + $0x58] sm:$0xff] %vm459, %v438
  %472 = vst.msk [vmem:[#allocation2 + $0x60] sm:$0xff] %vm459, %v439
  %473 = vst.msk [vmem:[#allocation2 + $0x68] sm:$0xff] %vm459, %v440
  %474 = vst.msk [vmem:[#allocation2 + $0x70] sm:$0xff] %vm459, %v441
  %475 = vst.msk [vmem:[#allocation2 + $0x78] sm:$0xff] %vm459, %v442
  %476 = vst.msk [vmem:[#allocation2 + $0x80] sm:$0xff] %vm459, %v443
  %477 = vst.msk [vmem:[#allocation2 + $0x88] sm:$0xff] %vm459, %v444
  %478 = vst.msk [vmem:[#allocation2 + $0x90] sm:$0xff] %vm459, %v445
  %479 = vst.msk [vmem:[#allocation2 + $0x98] sm:$0xff] %vm459, %v446
  %480 = vst.msk [vmem:[#allocation2 + $0xa0] sm:$0xff] %vm459, %v447
  %481 = vst.msk [vmem:[#allocation2 + $0xa8] sm:$0xff] %vm459, %v448
  %482 = vst.msk [vmem:[#allocation2 + $0xb0] sm:$0xff] %vm459, %v449
  %483 = vst.msk [vmem:[#allocation2 + $0xb8] sm:$0xff] %vm459, %v450
  %484 = vst.msk [vmem:[#allocation2 + $0xc0] sm:$0xff] %vm459, %v451
  %485 = vst.msk [vmem:[#allocation2 + $0xc8] sm:$0xff] %vm459, %v452
  %486 = vst.msk [vmem:[#allocation2 + $0xd0] sm:$0xff] %vm459, %v453
  %487 = vst.msk [vmem:[#allocation2 + $0xd8] sm:$0xff] %vm459, %v454
  %488 = vst.msk [vmem:[#allocation2 + $0xe0] sm:$0xff] %vm459, %v455
  %489 = vst.msk [vmem:[#allocation2 + $0xe8] sm:$0xff] %vm459, %v456
  %490 = vst.msk [vmem:[#allocation2 + $0xf0] sm:$0xff] %vm459, %v457
  %491 = vst.msk [vmem:[#allocation2 + $0xf8] sm:$0xff] %vm459, %v458
  // Predicated region
  $region14: #{tpu_custom_call.1} parent=0 // pred_check
    %p492 = pneg %p12
  $region15: #{tpu_custom_call.1} parent=0 // pred_check_branch
    %494 = sbr.rel (%p492) target = $region17
  $region16: #{tpu_custom_call.1} parent=0 // pred_region
    %v495 = vld [vmem:[#allocation2] sm:$0xff]
    %v496 = vld [vmem:[#allocation2 + $0x8] sm:$0xff]
    %v497 = vld [vmem:[#allocation2 + $0x10] sm:$0xff]
    %v498 = vld [vmem:[#allocation2 + $0x18] sm:$0xff]
    %v499 = vld [vmem:[#allocation2 + $0x20] sm:$0xff]
    %v500 = vld [vmem:[#allocation2 + $0x28] sm:$0xff]
    %v501 = vld [vmem:[#allocation2 + $0x30] sm:$0xff]
    %v502 = vld [vmem:[#allocation2 + $0x38] sm:$0xff]
    %v503 = vld [vmem:[#allocation2 + $0x40] sm:$0xff]
    %v504 = vld [vmem:[#allocation2 + $0x48] sm:$0xff]
    %v505 = vld [vmem:[#allocation2 + $0x50] sm:$0xff]
    %v506 = vld [vmem:[#allocation2 + $0x58] sm:$0xff]
    %v507 = vld [vmem:[#allocation2 + $0x60] sm:$0xff]
    %v508 = vld [vmem:[#allocation2 + $0x68] sm:$0xff]
    %v509 = vld [vmem:[#allocation2 + $0x70] sm:$0xff]
    %v510 = vld [vmem:[#allocation2 + $0x78] sm:$0xff]
    %v511 = vld [vmem:[#allocation2 + $0x80] sm:$0xff]
    %v512 = vld [vmem:[#allocation2 + $0x88] sm:$0xff]
    %v513 = vld [vmem:[#allocation2 + $0x90] sm:$0xff]
    %v514 = vld [vmem:[#allocation2 + $0x98] sm:$0xff]
    %v515 = vld [vmem:[#allocation2 + $0xa0] sm:$0xff]
    %v516 = vld [vmem:[#allocation2 + $0xa8] sm:$0xff]
    %v517 = vld [vmem:[#allocation2 + $0xb0] sm:$0xff]
    %v518 = vld [vmem:[#allocation2 + $0xb8] sm:$0xff]
    %v519 = vld [vmem:[#allocation2 + $0xc0] sm:$0xff]
    %v520 = vld [vmem:[#allocation2 + $0xc8] sm:$0xff]
    %v521 = vld [vmem:[#allocation2 + $0xd0] sm:$0xff]
    %v522 = vld [vmem:[#allocation2 + $0xd8] sm:$0xff]
    %v523 = vld [vmem:[#allocation2 + $0xe0] sm:$0xff]
    %v524 = vld [vmem:[#allocation2 + $0xe8] sm:$0xff]
    %v525 = vld [vmem:[#allocation2 + $0xf0] sm:$0xff]
    %v526 = vld [vmem:[#allocation2 + $0xf8] sm:$0xff]
    %v527 = vpack.c.bf16 %v496, %v495
    %v528 = vpack.c.bf16 %v498, %v497
    %v529 = vpack.c.bf16 %v500, %v499
    %v530 = vpack.c.bf16 %v502, %v501
    %v531 = vpack.c.bf16 %v504, %v503
    %v532 = vpack.c.bf16 %v506, %v505
    %v533 = vpack.c.bf16 %v508, %v507
    %v534 = vpack.c.bf16 %v510, %v509
    %v535 = vpack.c.bf16 %v512, %v511
    %v536 = vpack.c.bf16 %v514, %v513
    %v537 = vpack.c.bf16 %v516, %v515
    %v538 = vpack.c.bf16 %v518, %v517
    %v539 = vpack.c.bf16 %v520, %v519
    %v540 = vpack.c.bf16 %v522, %v521
    %v541 = vpack.c.bf16 %v524, %v523
    %v542 = vpack.c.bf16 %v526, %v525
    %v559 = vunpack.c.l.b16 %v527
    %v560 = vunpack.c.h.b16 %v527
    %v561 = vunpack.c.l.b16 %v528
    %v562 = vunpack.c.h.b16 %v528
    %v563 = vunpack.c.l.b16 %v529
    %v564 = vunpack.c.h.b16 %v529
    %v565 = vunpack.c.l.b16 %v530
    %v566 = vunpack.c.h.b16 %v530
    %v567 = vunpack.c.l.b16 %v531
    %v568 = vunpack.c.h.b16 %v531
    %v569 = vunpack.c.l.b16 %v532
    %v570 = vunpack.c.h.b16 %v532
    %v571 = vunpack.c.l.b16 %v533
    %v572 = vunpack.c.h.b16 %v533
    %v573 = vunpack.c.l.b16 %v534
    %v574 = vunpack.c.h.b16 %v534
    %v575 = vunpack.c.l.b16 %v535
    %v576 = vunpack.c.h.b16 %v535
    %v577 = vunpack.c.l.b16 %v536
    %v578 = vunpack.c.h.b16 %v536
    %v579 = vunpack.c.l.b16 %v537
    %v580 = vunpack.c.h.b16 %v537
    %v581 = vunpack.c.l.b16 %v538
    %v582 = vunpack.c.h.b16 %v538
    %v583 = vunpack.c.l.b16 %v539
    %v584 = vunpack.c.h.b16 %v539
    %v585 = vunpack.c.l.b16 %v540
    %v586 = vunpack.c.h.b16 %v540
    %v587 = vunpack.c.l.b16 %v541
    %v588 = vunpack.c.h.b16 %v541
    %v589 = vunpack.c.l.b16 %v542
    %v590 = vunpack.c.h.b16 %v542
    %v591 = vpack.c.b16 %v559, %v559
    %v592 = vpack.c.b16 %v560, %v560
    %v593 = vpack.c.b16 %v561, %v561
    %v594 = vpack.c.b16 %v562, %v562
    %v595 = vpack.c.b16 %v563, %v563
    %v596 = vpack.c.b16 %v564, %v564
    %v597 = vpack.c.b16 %v565, %v565
    %v598 = vpack.c.b16 %v566, %v566
    %v599 = vpack.c.b16 %v567, %v567
    %v600 = vpack.c.b16 %v568, %v568
    %v601 = vpack.c.b16 %v569, %v569
    %v602 = vpack.c.b16 %v570, %v570
    %v603 = vpack.c.b16 %v571, %v571
    %v604 = vpack.c.b16 %v572, %v572
    %v605 = vpack.c.b16 %v573, %v573
    %v606 = vpack.c.b16 %v574, %v574
    %v607 = vpack.c.b16 %v575, %v575
    %v608 = vpack.c.b16 %v576, %v576
    %v609 = vpack.c.b16 %v577, %v577
    %v610 = vpack.c.b16 %v578, %v578
    %v611 = vpack.c.b16 %v579, %v579
    %v612 = vpack.c.b16 %v580, %v580
    %v613 = vpack.c.b16 %v581, %v581
    %v614 = vpack.c.b16 %v582, %v582
    %v615 = vpack.c.b16 %v583, %v583
    %v616 = vpack.c.b16 %v584, %v584
    %v617 = vpack.c.b16 %v585, %v585
    %v618 = vpack.c.b16 %v586, %v586
    %v619 = vpack.c.b16 %v587, %v587
    %v620 = vpack.c.b16 %v588, %v588
    %v621 = vpack.c.b16 %v589, %v589
    %v622 = vpack.c.b16 %v590, %v590
    %vm655 = vcmask 519168
    %656 = vst.msk [vmem:[%s2] sm:$0xf] %vm655, %v591
    %657 = vst.msk [vmem:[%s2 + $0x4] sm:$0xf] %vm655, %v592
    %658 = vst.msk [vmem:[%s2 + $0x8] sm:$0xf] %vm655, %v593
    %659 = vst.msk [vmem:[%s2 + $0xc] sm:$0xf] %vm655, %v594
    %660 = vst.msk [vmem:[%s2 + $0x10] sm:$0xf] %vm655, %v595
    %661 = vst.msk [vmem:[%s2 + $0x14] sm:$0xf] %vm655, %v596
    %662 = vst.msk [vmem:[%s2 + $0x18] sm:$0xf] %vm655, %v597
    %663 = vst.msk [vmem:[%s2 + $0x1c] sm:$0xf] %vm655, %v598
    %664 = vst.msk [vmem:[%s2 + $0x20] sm:$0xf] %vm655, %v599
    %665 = vst.msk [vmem:[%s2 + $0x24] sm:$0xf] %vm655, %v600
    %666 = vst.msk [vmem:[%s2 + $0x28] sm:$0xf] %vm655, %v601
    %667 = vst.msk [vmem:[%s2 + $0x2c] sm:$0xf] %vm655, %v602
    %668 = vst.msk [vmem:[%s2 + $0x30] sm:$0xf] %vm655, %v603
    %669 = vst.msk [vmem:[%s2 + $0x34] sm:$0xf] %vm655, %v604
    %670 = vst.msk [vmem:[%s2 + $0x38] sm:$0xf] %vm655, %v605
    %671 = vst.msk [vmem:[%s2 + $0x3c] sm:$0xf] %vm655, %v606
    %672 = vst.msk [vmem:[%s2 + $0x40] sm:$0xf] %vm655, %v607
    %673 = vst.msk [vmem:[%s2 + $0x44] sm:$0xf] %vm655, %v608
    %674 = vst.msk [vmem:[%s2 + $0x48] sm:$0xf] %vm655, %v609
    %675 = vst.msk [vmem:[%s2 + $0x4c] sm:$0xf] %vm655, %v610
    %676 = vst.msk [vmem:[%s2 + $0x50] sm:$0xf] %vm655, %v611
    %677 = vst.msk [vmem:[%s2 + $0x54] sm:$0xf] %vm655, %v612
    %678 = vst.msk [vmem:[%s2 + $0x58] sm:$0xf] %vm655, %v613
    %679 = vst.msk [vmem:[%s2 + $0x5c] sm:$0xf] %vm655, %v614
    %680 = vst.msk [vmem:[%s2 + $0x60] sm:$0xf] %vm655, %v615
    %681 = vst.msk [vmem:[%s2 + $0x64] sm:$0xf] %vm655, %v616
    %682 = vst.msk [vmem:[%s2 + $0x68] sm:$0xf] %vm655, %v617
    %683 = vst.msk [vmem:[%s2 + $0x6c] sm:$0xf] %vm655, %v618
    %684 = vst.msk [vmem:[%s2 + $0x70] sm:$0xf] %vm655, %v619
    %685 = vst.msk [vmem:[%s2 + $0x74] sm:$0xf] %vm655, %v620
    %686 = vst.msk [vmem:[%s2 + $0x78] sm:$0xf] %vm655, %v621
    %687 = vst.msk [vmem:[%s2 + $0x7c] sm:$0xf] %vm655, %v622
  $region17: #{tpu_custom_call.1} parent=0 // pred_fallthru
    _
  // Predicated region
  $region18: #{tpu_custom_call.1} parent=0 // pred_check
    _
  $region19: #{tpu_custom_call.1} parent=0 // pred_check_branch
    %689 = sbr.rel (0) target = $region21
  $region20: #{tpu_custom_call.1} parent=0 // pred_region
    _
  $region21: #{tpu_custom_call.1} parent=0 // pred_fallthru
    _
  // Predicated region
  $region22: #{tpu_custom_call.1} parent=0 // pred_check
    _
  $region23: #{tpu_custom_call.1} parent=0 // pred_check_branch
    %691 = sbr.rel (0) target = $region25
  $region24: #{tpu_custom_call.1} parent=0 // pred_region
    _
  $region25: #{tpu_custom_call.1} parent=0 // pred_fallthru
    _

</llo_original>
